<compile_context>
chip_gen: v7x
topology: tpu7x:2x2x1
jax: 0.10.0
libtpu: 0.0.40
codegen_flags: <defaults>
</compile_context>

<pallas_src>
import functools
import numpy as np

import jax
import jax.numpy as jnp
from jax.experimental import pallas as pl
from jax.experimental.pallas import tpu as pltpu


# ----------------------------------------------------------------------------
# Pallas kernel 1: fused bilinear fit   res[n] = w1 @ a[n] @ w2   (n = B*C rows)
# ----------------------------------------------------------------------------
def _bilinear_fit_kernel(a_ref, w1_ref, w2_ref, o_ref):
    # a_ref : (tbc, Hs, Ws)   tile of the folded B*C axis
    # w1_ref: (Ht, Hs)        full (tiny)
    # w2_ref: (Ws, Wt)        full (tiny)
    # o_ref : (tbc, Ht, Wt)
    tbc, hs, ws = a_ref.shape
    ht = w1_ref.shape[0]
    wt = w2_ref.shape[1]

    a = a_ref[...]                                   # activation dtype
    w2 = w2_ref[...]                                 # same dtype as activations
    w1 = w1_ref[...].astype(jnp.float32)

    # Step 1: contract Ws with w2 as ONE big 2-D MXU matmul (fold tbc*Hs into M).
    q = jnp.dot(a.reshape(tbc * hs, ws), w2,
                preferred_element_type=jnp.float32)  # (tbc*Hs, Wt), f32 accumulation
    q = q.reshape(tbc, hs, wt)                       # stays in VMEM — never hits HBM

    # Step 2: contract Hs with w1, batched over the tile.  'nth,nhu->ntu' is the
    # standard bmm form that Mosaic lowers directly (w1 broadcast over the batch);
    # avoids any in-kernel major-dim transpose.  HBM traffic, not MXU, dominates
    # this kernel (K = Hs/Ws is tiny), so the per-row matmuls are acceptable.
    w1b = jnp.broadcast_to(w1, (tbc, ht, hs))
    r = jnp.einsum('nth,nhu->ntu', w1b, q,
                   preferred_element_type=jnp.float32)   # (tbc, Ht, Wt)

    o_ref[...] = r.astype(o_ref.dtype)


def bilinear_fit(a, w1, w2, *, out_dtype=jnp.float32,
                 tbc_pref=256, vmem_budget_bytes=6 * 1024 * 1024):
    """res[b, c] = w1 @ a[b, c] @ w2 for every (b, c), fused in one Pallas kernel."""
    B, C, Hs, Ws = map(int, a.shape)
    Ht = int(w1.shape[0])
    Wt = int(w2.shape[1])
    BC = B * C

    # MXU inputs: match w2 to the activation dtype (native bf16 path on v6e/v7x
    # when activations are bf16); accumulation is always f32 inside the kernel.
    w1c = w1.astype(jnp.float32)
    w2c = w2.astype(a.dtype)

    a_bytes = jnp.dtype(a.dtype).itemsize
    o_bytes = jnp.dtype(out_dtype).itemsize
    # Per-(B*C)-row VMEM cost: double-buffered in/out blocks + f32 temporaries
    # (q, broadcast w1, r) that live only inside the kernel.
    per_row = (2 * (Hs * Ws * a_bytes + Ht * Wt * o_bytes)
               + 4 * (Hs * Wt + Ht * Hs + Ht * Wt))
    tbc = int(max(1, min(tbc_pref, BC, vmem_budget_bytes // per_row)))
    if tbc >= 8:
        tbc -= tbc % 8          # keep the folded (tbc*Hs, Ws) reshape sublane-clean

    grid = (pl.cdiv(BC, tbc),)  # ragged last tile is masked by Pallas on writeback

    out = pl.pallas_call(
        _bilinear_fit_kernel,
        out_shape=jax.ShapeDtypeStruct((BC, Ht, Wt), out_dtype),
        grid=grid,
        in_specs=[
            pl.BlockSpec((tbc, Hs, Ws), lambda i: (i, 0, 0)),
            pl.BlockSpec((Ht, Hs), lambda i: (0, 0)),
            pl.BlockSpec((Ws, Wt), lambda i: (0, 0)),
        ],
        out_specs=pl.BlockSpec((tbc, Ht, Wt), lambda i: (i, 0, 0)),
        compiler_params=pltpu.CompilerParams(
            dimension_semantics=("parallel",)),
    )(a.reshape(BC, Hs, Ws), w1c, w2c)

    return out.reshape(B, C, Ht, Wt)


# ----------------------------------------------------------------------------
# Pallas kernel 2: N-way channel concat (NCHW, dim=1) as pure HBM->HBM DMA
# ----------------------------------------------------------------------------
def _concat_dma_kernel(*refs, chans, offsets, batch):
    # refs = (*in_hbm_refs, out_hbm_ref, dma_sems)
    n = len(chans)
    in_refs = refs[:n]
    o_ref = refs[n]
    sem = refs[n + 1]

    copies = []
    for k in range(n):                       # static python loops (unrolled)
        off, c = offsets[k], chans[k]
        for b in range(batch):
            cp = pltpu.make_async_copy(
                in_refs[k].at[b],                       # (C_k, HW) contiguous src
                o_ref.at[b, off:off + c, :],            # (C_k, HW) contiguous dst
                sem.at[k, b])
            cp.start()                       # start everything first -> overlap
            copies.append(cp)
    for cp in copies:
        cp.wait()


def concat_channels(tensors):
    """jnp.concatenate(tensors, axis=1) for NCHW tensors, one DMA-only Pallas launch."""
    B, _, H, W = map(int, tensors[0].shape)
    HW = H * W
    chans = [int(t.shape[1]) for t in tensors]
    Ctot = sum(chans)
    out_dtype = jnp.result_type(*[t.dtype for t in tensors])

    # DMA cannot cast, so any piece whose dtype differs from the promoted output
    # dtype is cast up-front (a no-op in the usual all-same-dtype case).
    # The reshape to (B, C, H*W) is free (metadata only).
    flat = [t.reshape(B, c, HW).astype(out_dtype) for t, c in zip(tensors, chans)]

    if len(flat) == 1:
        return flat[0].reshape(B, Ctot, H, W)

    offsets = []
    off = 0
    for c in chans:
        offsets.append(off)
        off += c

    out = pl.pallas_call(
        functools.partial(_concat_dma_kernel, chans=tuple(chans),
                          offsets=tuple(offsets), batch=B),
        out_shape=jax.ShapeDtypeStruct((B, Ctot, HW), out_dtype),
        in_specs=[pl.BlockSpec(memory_space=pl.ANY) for _ in flat],
        out_specs=pl.BlockSpec(memory_space=pl.ANY),
        scratch_shapes=[pltpu.SemaphoreType.DMA((len(flat), B))],
        compiler_params=pltpu.CompilerParams(has_side_effects=True),
    )(*flat)
    return out.reshape(B, Ctot, H, W)


# ----------------------------------------------------------------------------
# Route module (JAX port of the PyTorch nn.Module)
# ----------------------------------------------------------------------------
def _xavier_uniform(key, shape, dtype=jnp.float32):
    # torch.nn.init.xavier_uniform_ for a 2D tensor (fan_out, fan_in) = shape
    fan_out, fan_in = shape
    bound = float(np.sqrt(6.0 / (fan_in + fan_out)))
    return jax.random.uniform(key, shape, dtype, minval=-bound, maxval=bound)


class Route:
    def __init__(self, ind_arr, key, learning_params=False, fitting_mode='reshape'):
        self.ind_arr = ind_arr
        self.layer_outputs_arr = None
        self.learning_params = learning_params
        self.mode = fitting_mode
        self._key = key
        self.params = {}   # persistent "parameters", cached per route index

    def _get_fit_weights(self, a_shape, target_dim, ind):
        k1n, k2n = 'w1_{}'.format(ind), 'w2_{}'.format(ind)
        if k1n not in self.params:       # create once, reuse on later forwards
            self._key, k1, k2 = jax.random.split(self._key, 3)
            self.params[k1n] = _xavier_uniform(k1, (target_dim[2], a_shape[2]))
            self.params[k2n] = _xavier_uniform(k2, (a_shape[3], target_dim[3]))
        return self.params[k1n], self.params[k2n]

    def _fit_feature_map_dimensions_by_matrix_mult(self, a, target_dim, ind):
        w1, w2 = self._get_fit_weights(a.shape, target_dim, ind)
        # hot path: fused (w1 @ a[b, c] @ w2) over all (b, c) in ONE Pallas kernel
        return bilinear_fit(a, w1, w2, out_dtype=jnp.float32)

    @staticmethod
    def _fit_feature_map_dimensions_by_reshape(a, target_dim):
        return jnp.reshape(a, (target_dim[0], -1, target_dim[2], target_dim[3]))

    def check_and_fit_feature_map(self, layer_out, dims, ind):
        if dims[2] == layer_out.shape[2] and dims[3] == layer_out.shape[3]:
            return layer_out
        elif self.mode == 'reshape':
            return self._fit_feature_map_dimensions_by_reshape(layer_out, dims)
        else:
            return self._fit_feature_map_dimensions_by_matrix_mult(layer_out, dims, ind)

    def __call__(self, x):
        return self.forward(x)

    def forward(self, x):
        if self.layer_outputs_arr is None:
            raise Exception('You should assign layers outputs array to prop of '
                            'Route class instance: outputs_arr')
        d0, d1, d2, d3 = x.shape
        if len(self.ind_arr) == 1:
            return self.layer_outputs_arr[self.ind_arr[0]]
        elif len(self.ind_arr) > 1:
            result = self.layer_outputs_arr[self.ind_arr[0]]
            # Only the spatial dims of `result.shape` are consulted and they never
            # change across iterations, so collect all pieces then do ONE
            # single-pass N-way DMA concat (O(N) HBM traffic, one kernel launch).
            pieces = [result]
            for i in self.ind_arr[1:]:
                pieces.append(self.check_and_fit_feature_map(
                    self.layer_outputs_arr[i], result.shape, i))
            # TODO(synk): write the fitted piece directly into the concat output at
            # its channel offset (input_output_aliases) to save one HBM round-trip.
            return concat_channels(pieces)


# ----------------------------------------------------------------------------
# Example run
# ----------------------------------------------------------------------------
if __name__ == "__main__":
    key = jax.random.PRNGKey(0)
    kx, k0, k1, k2, kr = jax.random.split(key, 5)

    # Incoming tensor x (only its shape is inspected by Route.forward)
    x = jax.random.normal(kx, (2, 4, 16, 16), jnp.float32)

    # Synthetic "previous layer outputs":
    #   layer 0: same spatial size (direct concat)
    #   layer 1: same spatial size (direct concat)
    #   layer 2: smaller spatial size -> triggers matrix_mult fitting (fused Pallas kernel)
    layer_outputs = [
        jax.random.normal(k0, (2, 4, 16, 16), jnp.float32),
        jax.random.normal(k1, (2, 6, 16, 16), jnp.float32),
        jax.random.normal(k2, (2, 3, 8, 8), jnp.float32),
    ]

    route = Route(ind_arr=[0, 1, 2], key=kr, learning_params=False,
                  fitting_mode='matrix_mult')
    route.layer_outputs_arr = layer_outputs

    out = route(x)
    out = jax.block_until_ready(out)
    assert out.shape == (2, 4 + 6 + 3, 16, 16), out.shape

    # Reference check in plain JAX (same weights, same semantics)
    w1 = route.params['w1_2']
    w2 = route.params['w2_2']
    fitted_ref = jnp.einsum('ts,bcsw,wu->bctu', w1, layer_outputs[2], w2)
    ref = jnp.concatenate([layer_outputs[0], layer_outputs[1], fitted_ref], axis=1)
    assert jnp.allclose(out, ref, atol=1e-4, rtol=1e-4)

    print("KERNEL_OK")
</pallas_src>

<mosaic_0001>
module attributes {stable_mosaic.version = 11 : i64} {
  func.func @_bilinear_fit_kernel(%arg0: i32, %arg1: memref<6x8x8xf32, #tpu.memory_space<vmem>>, %arg2: memref<16x8xf32, #tpu.memory_space<vmem>>, %arg3: memref<8x16xf32, #tpu.memory_space<vmem>>, %arg4: memref<6x16x16xf32, #tpu.memory_space<vmem>>) attributes {dimension_semantics = [#tpu.dimension_semantics<parallel>], iteration_bounds = array<i64: 1>, scalar_prefetch = 0 : i64, scratch_operands = 0 : i64, tpu.core_type = #tpu.core_type<tc>, window_params = [{transform_indices = @transform_0, window_bounds = array<i64: 6, 8, 8>}, {pipeline_mode = #tpu.pipeline_mode<synchronous>, transform_indices = @transform_1, window_bounds = array<i64: 16, 8>}, {pipeline_mode = #tpu.pipeline_mode<synchronous>, transform_indices = @transform_2, window_bounds = array<i64: 8, 16>}, {transform_indices = @transform_3, window_bounds = array<i64: 6, 16, 16>}]} {
    %c0 = arith.constant 0 : index
    %c0_0 = arith.constant 0 : index
    %c0_1 = arith.constant 0 : index
    %0 = vector.load %arg1[%c0, %c0_0, %c0_1] : memref<6x8x8xf32, #tpu.memory_space<vmem>>, vector<6x8x8xf32>
    %c0_2 = arith.constant 0 : index
    %c0_3 = arith.constant 0 : index
    %1 = vector.load %arg3[%c0_2, %c0_3] : memref<8x16xf32, #tpu.memory_space<vmem>>, vector<8x16xf32>
    %c0_4 = arith.constant 0 : index
    %c0_5 = arith.constant 0 : index
    %2 = vector.load %arg2[%c0_4, %c0_5] : memref<16x8xf32, #tpu.memory_space<vmem>>, vector<16x8xf32>
    %3 = vector.shape_cast %0 : vector<6x8x8xf32> to vector<48x8xf32>
    %cst = arith.constant dense<0.000000e+00> : vector<48x16xf32>
    %4 = tpu.matmul %3, %1, %cst {dimension_numbers = #tpu.dot_dimension_numbers<[1], [0], [0], [1], [0, 0, 1, 1], [], []>} : vector<48x8xf32>, vector<8x16xf32>, vector<48x16xf32> -> vector<48x16xf32>
    %5 = vector.shape_cast %4 : vector<48x16xf32> to vector<6x8x16xf32>
    %6 = vector.shape_cast %2 : vector<16x8xf32> to vector<1x16x8xf32>
    %7 = vector.broadcast %6 : vector<1x16x8xf32> to vector<6x16x8xf32>
    "tpu.trace_start"() <{level = 10 : i32, message = "nth,nhu->ntu"}> : () -> ()
    %cst_6 = arith.constant dense<0.000000e+00> : vector<6x16x16xf32>
    %8 = tpu.matmul %7, %5, %cst_6 {dimension_numbers = #tpu.dot_dimension_numbers<[2], [1], [1], [2], [0, 0, 0, 1, 1, 2], [0], [0]>} : vector<6x16x8xf32>, vector<6x8x16xf32>, vector<6x16x16xf32> -> vector<6x16x16xf32>
    "tpu.trace_stop"() : () -> ()
    %c0_7 = arith.constant 0 : index
    %c0_8 = arith.constant 0 : index
    %c0_9 = arith.constant 0 : index
    %9 = vector.load %arg4[%c0_7, %c0_8, %c0_9] : memref<6x16x16xf32, #tpu.memory_space<vmem>>, vector<6x16x16xf32>
    tpu.vector_store %arg4[%c0_7, %c0_8, %c0_9], %8 {strides = array<i32>} : memref<6x16x16xf32, #tpu.memory_space<vmem>>, vector<6x16x16xf32>,
    return
  }
  func.func @transform_0(%arg0: i32) -> (i32, i32, i32) {
    %c0_i32 = arith.constant 0 : i32
    %c0_i32_0 = arith.constant 0 : i32
    %c0_i32_1 = arith.constant 0 : i32
    return %arg0, %c0_i32, %c0_i32_0 : i32, i32, i32
  }
  func.func @transform_1(%arg0: i32) -> (i32, i32) {
    %c0_i32 = arith.constant 0 : i32
    %c0_i32_0 = arith.constant 0 : i32
    %c0_i32_1 = arith.constant 0 : i32
    return %c0_i32, %c0_i32_0 : i32, i32
  }
  func.func @transform_2(%arg0: i32) -> (i32, i32) {
    %c0_i32 = arith.constant 0 : i32
    %c0_i32_0 = arith.constant 0 : i32
    %c0_i32_1 = arith.constant 0 : i32
    return %c0_i32, %c0_i32_0 : i32, i32
  }
  func.func @transform_3(%arg0: i32) -> (i32, i32, i32) {
    %c0_i32 = arith.constant 0 : i32
    %c0_i32_0 = arith.constant 0 : i32
    %c0_i32_1 = arith.constant 0 : i32
    return %arg0, %c0_i32, %c0_i32_0 : i32, i32, i32
  }
}

</mosaic_0001>

<llo_original>
// kernel: tpu_custom_call.1
$region0: #{tpu_custom_call.1}
  #allocation0 [shape = 'u32[]', space=smem, size = 0x4, offset = 0x4, fixed_abs, tag = 'smem constant byte address 0x4 - core index']
  #allocation1 [shape = 'u32[144,128]{1,0:T(1,128)}', space=vmem, size = 0x12000, scoped, tag = 'internal scratch']
  %s0 = inlined_call_operand.hbm [shape: f32[6,8,8], index: 0, kind: input, shape index: {}]
  %s1 = inlined_call_operand.vmem [shape: f32[16,8], index: 1, kind: input, shape index: {}]
  %s2 = inlined_call_operand.vmem [shape: f32[8,16], index: 2, kind: input, shape index: {}]
  %s3 = inlined_call_operand.hbm [shape: f32[6,16,16], index: 3, kind: output, shape index: {}]
  %s4 = sld [smem:[#allocation0]]
  $region26: #{tpu_custom_call.1} parent=0
    _
  %s6 = ssub.s32 1, %s4
  %s7 = scalar_select 0, %s6, %s4
  $region1: #{tpu_custom_call.1} parent=0
    #allocation2 [shape = 'u8[24576]{0}', space=vmem, size = 0x6000, scoped, tag = 'input window, operand 0, single buffered']
    #allocation3 [shape = 's32[1]{0}', space=sflag, size = 0x4, scoped, tag = 'scoped memory for tpu_custom_call.1']
    #allocation4 [shape = 's32[1]{0}', space=sflag, size = 0x4, scoped, tag = 'scoped memory for tpu_custom_call.1']
    #allocation5 [shape = 'u8[49152]{0}', space=vmem, size = 0xc000, scoped, tag = 'output window, operand 0, single buffered']
    %8 = vsyncpa [#allocation3], 0
    %9 = vsyncpa [#allocation4], 0
    // Predicated region
    $region2: #{tpu_custom_call.1} parent=1 // pred_check
      _
    $region3: #{tpu_custom_call.1} parent=1 // pred_check_branch
      %11 = sbr.rel (0) target = $region5
    $region4: #{tpu_custom_call.1} parent=1 // pred_region
      %s13 = ssub.s32 768, 768
      %14 = vsyncadd [#allocation3], %s13
      %s15 = sshll.u32 [#allocation2], 4
      %s16 = int_to_ptr.vmem [resolvable:$true] %s15
      %21 = dma.hbm_to_vmem [thread:$0]  %s0, 768, %s16, [#allocation3], 128, 128, 8
    $region5: #{tpu_custom_call.1} parent=1 // pred_fallthru
      _
    // Predicated region
    $region6: #{tpu_custom_call.1} parent=1 // pred_check
      _
    $region7: #{tpu_custom_call.1} parent=1 // pred_check_branch
      %23 = sbr.rel (0) target = $region9
    $region8: #{tpu_custom_call.1} parent=1 // pred_region
      _
    $region9: #{tpu_custom_call.1} parent=1 // pred_fallthru
      _
    // Predicated region
    $region10: #{tpu_custom_call.1} parent=1 // pred_check
      _
    $region11: #{tpu_custom_call.1} parent=1 // pred_check_branch
      %25 = sbr.rel (0) target = $region13
    $region12: #{tpu_custom_call.1} parent=1 // pred_region
      _
    $region13: #{tpu_custom_call.1} parent=1 // pred_fallthru
      _
    // Predicated region
    $region14: #{tpu_custom_call.1} parent=1 // pred_check
      _
    $region15: #{tpu_custom_call.1} parent=1 // pred_check_branch
      %27 = sbr.rel (0) target = $region17
    $region16: #{tpu_custom_call.1} parent=1 // pred_region
      %28 = dma.done [#allocation3], 768
    $region17: #{tpu_custom_call.1} parent=1 // pred_fallthru
      _
    %v29 = vld [vmem:[#allocation2] sm:$0xff]
    %v30 = vld [vmem:[#allocation2 + $0x8] sm:$0xff]
    %v31 = vld [vmem:[#allocation2 + $0x10] sm:$0xff]
    %v32 = vld [vmem:[#allocation2 + $0x18] sm:$0xff]
    %v33 = vld [vmem:[#allocation2 + $0x20] sm:$0xff]
    %v34 = vld [vmem:[#allocation2 + $0x28] sm:$0xff]
    %v35 = vld [vmem:[%s2] sm:$0xff]
    %v36 = vld [vmem:[%s1] sm:$0xff]
    %v37 = vld [vmem:[%s1 + $0x8] sm:$0xff]
    %vm38 = vcmask 64512
    %v40 = vsel %vm38, %v29, 0
    %v43 = vsel %vm38, %v30, 0
    %v46 = vsel %vm38, %v31, 0
    %v49 = vsel %vm38, %v32, 0
    %v52 = vsel %vm38, %v33, 0
    %v55 = vsel %vm38, %v34, 0
    %57 = vmatprep.subr.mxu0 0.0
    %58 = vmatpush1.msra.mxu0 %v35
    %59 = vmatprep.subr.mxu0 0.0
    %60 = vmatpush1.msra.mxu0 0.0
    %61 = vmatprep.subr.mxu0 0.0
    %62 = vmatpush1.msra.mxu0 0.0
    %63 = vmatprep.subr.mxu0 0.0
    %64 = vmatpush1.msra.mxu0 0.0
    %65 = vmatprep.subr.mxu0 0.0
    %66 = vmatpush1.msra.mxu0 0.0
    %67 = vmatprep.subr.mxu0 0.0
    %68 = vmatpush1.msra.mxu0 0.0
    %69 = vmatprep.subr.mxu0 0.0
    %70 = vmatpush1.msra.mxu0 0.0
    %71 = vmatprep.subr.mxu0 0.0
    %72 = vmatpush1.msra.mxu0 0.0
    %73 = vmatprep.subr.mxu0 0.0
    %74 = vmatpush1.msra.mxu0 0.0
    %75 = vmatprep.subr.mxu0 0.0
    %76 = vmatpush1.msra.mxu0 0.0
    %77 = vmatprep.subr.mxu0 0.0
    %78 = vmatpush1.msra.mxu0 0.0
    %79 = vmatprep.subr.mxu0 0.0
    %80 = vmatpush1.msra.mxu0 0.0
    %81 = vmatprep.subr.mxu0 0.0
    %82 = vmatpush1.msra.mxu0 0.0
    %83 = vmatprep.subr.mxu0 0.0
    %84 = vmatpush1.msra.mxu0 0.0
    %85 = vmatprep.subr.mxu0 0.0
    %86 = vmatpush1.msra.mxu0 0.0
    %87 = vmatprep.subr.mxu0 0.0
    %88 = vmatpush1.msra.mxu0 0.0
    %89 = vmatprep.subr.mxu0 0.0
    %90 = vmatpush1.msra.mxu0 0.0
    %91 = vmatprep.subr.mxu0 0.0
    %92 = vmatpush1.msra.mxu0 0.0
    %93 = vmatprep.subr.mxu0 0.0
    %94 = vmatpush1.msra.mxu0 0.0
    %95 = vmatprep.subr.mxu0 0.0
    %96 = vmatpush1.msra.mxu0 0.0
    %97 = vmatprep.subr.mxu0 0.0
    %98 = vmatpush1.msra.mxu0 0.0
    %99 = vmatprep.subr.mxu0 0.0
    %100 = vmatpush1.msra.mxu0 0.0
    %101 = vmatprep.subr.mxu0 0.0
    %102 = vmatpush1.msra.mxu0 0.0
    %103 = vmatprep.subr.mxu0 0.0
    %104 = vmatpush1.msra.mxu0 0.0
    %105 = vmatprep.subr.mxu0 0.0
    %106 = vmatpush1.msra.mxu0 0.0
    %107 = vmatprep.subr.mxu0 0.0
    %108 = vmatpush1.msra.mxu0 0.0
    %109 = vmatprep.subr.mxu0 0.0
    %110 = vmatpush1.msra.mxu0 0.0
    %111 = vmatprep.subr.mxu0 0.0
    %112 = vmatpush1.msra.mxu0 0.0
    %113 = vmatprep.subr.mxu0 0.0
    %114 = vmatpush1.msra.mxu0 0.0
    %115 = vmatprep.subr.mxu0 0.0
    %116 = vmatpush1.msra.mxu0 0.0
    %117 = vmatprep.subr.mxu0 0.0
    %118 = vmatpush1.msra.mxu0 0.0
    %119 = vmatprep.subr.mxu0 0.0
    %120 = vmatpush1.msra.mxu0 0.0
    %121 = vmatprep.mubr.f32.mxu0 0.0
    %122 = vmatmul.mubr.f32.gmra.mrb[0].mxu0 %v40
    %v123 = vpop.f32.mrb[0].mxu0
    %v124 = vadd.f32 0.0, %v123
    %v125 = vpop.f32.mrb[0].mxu0
    %126 = vmatprep.mubr.f32.mxu0 0.0
    %127 = vmatmul.mubr.f32.gmra.mrb[0].mxu0 %v43
    %v128 = vpop.f32.mrb[0].mxu0
    %v129 = vadd.f32 0.0, %v128
    %v130 = vpop.f32.mrb[0].mxu0
    %131 = vmatprep.mubr.f32.mxu0 0.0
    %132 = vmatmul.mubr.f32.gmra.mrb[0].mxu0 %v46
    %v133 = vpop.f32.mrb[0].mxu0
    %v134 = vadd.f32 0.0, %v133
    %v135 = vpop.f32.mrb[0].mxu0
    %136 = vmatprep.mubr.f32.mxu0 0.0
    %137 = vmatmul.mubr.f32.gmra.mrb[0].mxu0 %v49
    %v138 = vpop.f32.mrb[0].mxu0
    %v139 = vadd.f32 0.0, %v138
    %v140 = vpop.f32.mrb[0].mxu0
    %141 = vmatprep.mubr.f32.mxu0 0.0
    %142 = vmatmul.mubr.f32.gmra.mrb[0].mxu0 %v52
    %v143 = vpop.f32.mrb[0].mxu0
    %v144 = vadd.f32 0.0, %v143
    %v145 = vpop.f32.mrb[0].mxu0
    %146 = vmatprep.mubr.f32.mxu0 0.0
    %147 = vmatmul.mubr.f32.gmra.mrb[0].mxu0 %v55
    %v148 = vpop.f32.mrb[0].mxu0
    %v149 = vadd.f32 0.0, %v148
    %v150 = vpop.f32.mrb[0].mxu0
    %151 = vdwg.mxu0
    %v153 = vsel %vm38, %v36, 0
    %v156 = vsel %vm38, %v37, 0
    %158 = vmatprep.subr.mxu0 0.0
    %159 = vmatpush1.msra.mxu0 %v124
    %160 = vmatprep.subr.mxu0 0.0
    %161 = vmatpush1.msra.mxu0 0.0
    %162 = vmatprep.subr.mxu0 0.0
    %163 = vmatpush1.msra.mxu0 0.0
    %164 = vmatprep.subr.mxu0 0.0
    %165 = vmatpush1.msra.mxu0 0.0
    %166 = vmatprep.subr.mxu0 0.0
    %167 = vmatpush1.msra.mxu0 0.0
    %168 = vmatprep.subr.mxu0 0.0
    %169 = vmatpush1.msra.mxu0 0.0
    %170 = vmatprep.subr.mxu0 0.0
    %171 = vmatpush1.msra.mxu0 0.0
    %172 = vmatprep.subr.mxu0 0.0
    %173 = vmatpush1.msra.mxu0 0.0
    %174 = vmatprep.subr.mxu0 0.0
    %175 = vmatpush1.msra.mxu0 0.0
    %176 = vmatprep.subr.mxu0 0.0
    %177 = vmatpush1.msra.mxu0 0.0
    %178 = vmatprep.subr.mxu0 0.0
    %179 = vmatpush1.msra.mxu0 0.0
    %180 = vmatprep.subr.mxu0 0.0
    %181 = vmatpush1.msra.mxu0 0.0
    %182 = vmatprep.subr.mxu0 0.0
    %183 = vmatpush1.msra.mxu0 0.0
    %184 = vmatprep.subr.mxu0 0.0
    %185 = vmatpush1.msra.mxu0 0.0
    %186 = vmatprep.subr.mxu0 0.0
    %187 = vmatpush1.msra.mxu0 0.0
    %188 = vmatprep.subr.mxu0 0.0
    %189 = vmatpush1.msra.mxu0 0.0
    %190 = vmatprep.subr.mxu0 0.0
    %191 = vmatpush1.msra.mxu0 0.0
    %192 = vmatprep.subr.mxu0 0.0
    %193 = vmatpush1.msra.mxu0 0.0
    %194 = vmatprep.subr.mxu0 0.0
    %195 = vmatpush1.msra.mxu0 0.0
    %196 = vmatprep.subr.mxu0 0.0
    %197 = vmatpush1.msra.mxu0 0.0
    %198 = vmatprep.subr.mxu0 0.0
    %199 = vmatpush1.msra.mxu0 0.0
    %200 = vmatprep.subr.mxu0 0.0
    %201 = vmatpush1.msra.mxu0 0.0
    %202 = vmatprep.subr.mxu0 0.0
    %203 = vmatpush1.msra.mxu0 0.0
    %204 = vmatprep.subr.mxu0 0.0
    %205 = vmatpush1.msra.mxu0 0.0
    %206 = vmatprep.subr.mxu0 0.0
    %207 = vmatpush1.msra.mxu0 0.0
    %208 = vmatprep.subr.mxu0 0.0
    %209 = vmatpush1.msra.mxu0 0.0
    %210 = vmatprep.subr.mxu0 0.0
    %211 = vmatpush1.msra.mxu0 0.0
    %212 = vmatprep.subr.mxu0 0.0
    %213 = vmatpush1.msra.mxu0 0.0
    %214 = vmatprep.subr.mxu0 0.0
    %215 = vmatpush1.msra.mxu0 0.0
    %216 = vmatprep.subr.mxu0 0.0
    %217 = vmatpush1.msra.mxu0 0.0
    %218 = vmatprep.subr.mxu0 0.0
    %219 = vmatpush1.msra.mxu0 0.0
    %220 = vmatprep.subr.mxu0 0.0
    %221 = vmatpush1.msra.mxu0 0.0
    %222 = vmatprep.mubr.f32.mxu0 0.0
    %223 = vmatmul.mubr.f32.gmra.mrb[0].mxu0 %v153
    %v224 = vpop.f32.mrb[0].mxu0
    %v225 = vadd.f32 0.0, %v224
    %v226 = vpop.f32.mrb[0].mxu0
    %227 = vmatprep.mubr.f32.mxu0 0.0
    %228 = vmatmul.mubr.f32.gmra.mrb[0].mxu0 %v156
    %v229 = vpop.f32.mrb[0].mxu0
    %v230 = vadd.f32 0.0, %v229
    %v231 = vpop.f32.mrb[0].mxu0
    %232 = vdwg.mxu0
    %233 = vmatprep.subr.mxu0 0.0
    %234 = vmatpush1.msra.mxu0 %v129
    %235 = vmatprep.subr.mxu0 0.0
    %236 = vmatpush1.msra.mxu0 0.0
    %237 = vmatprep.subr.mxu0 0.0
    %238 = vmatpush1.msra.mxu0 0.0
    %239 = vmatprep.subr.mxu0 0.0
    %240 = vmatpush1.msra.mxu0 0.0
    %241 = vmatprep.subr.mxu0 0.0
    %242 = vmatpush1.msra.mxu0 0.0
    %243 = vmatprep.subr.mxu0 0.0
    %244 = vmatpush1.msra.mxu0 0.0
    %245 = vmatprep.subr.mxu0 0.0
    %246 = vmatpush1.msra.mxu0 0.0
    %247 = vmatprep.subr.mxu0 0.0
    %248 = vmatpush1.msra.mxu0 0.0
    %249 = vmatprep.subr.mxu0 0.0
    %250 = vmatpush1.msra.mxu0 0.0
    %251 = vmatprep.subr.mxu0 0.0
    %252 = vmatpush1.msra.mxu0 0.0
    %253 = vmatprep.subr.mxu0 0.0
    %254 = vmatpush1.msra.mxu0 0.0
    %255 = vmatprep.subr.mxu0 0.0
    %256 = vmatpush1.msra.mxu0 0.0
    %257 = vmatprep.subr.mxu0 0.0
    %258 = vmatpush1.msra.mxu0 0.0
    %259 = vmatprep.subr.mxu0 0.0
    %260 = vmatpush1.msra.mxu0 0.0
    %261 = vmatprep.subr.mxu0 0.0
    %262 = vmatpush1.msra.mxu0 0.0
    %263 = vmatprep.subr.mxu0 0.0
    %264 = vmatpush1.msra.mxu0 0.0
    %265 = vmatprep.subr.mxu0 0.0
    %266 = vmatpush1.msra.mxu0 0.0
    %267 = vmatprep.subr.mxu0 0.0
    %268 = vmatpush1.msra.mxu0 0.0
    %269 = vmatprep.subr.mxu0 0.0
    %270 = vmatpush1.msra.mxu0 0.0
    %271 = vmatprep.subr.mxu0 0.0
    %272 = vmatpush1.msra.mxu0 0.0
    %273 = vmatprep.subr.mxu0 0.0
    %274 = vmatpush1.msra.mxu0 0.0
    %275 = vmatprep.subr.mxu0 0.0
    %276 = vmatpush1.msra.mxu0 0.0
    %277 = vmatprep.subr.mxu0 0.0
    %278 = vmatpush1.msra.mxu0 0.0
    %279 = vmatprep.subr.mxu0 0.0
    %280 = vmatpush1.msra.mxu0 0.0
    %281 = vmatprep.subr.mxu0 0.0
    %282 = vmatpush1.msra.mxu0 0.0
    %283 = vmatprep.subr.mxu0 0.0
    %284 = vmatpush1.msra.mxu0 0.0
    %285 = vmatprep.subr.mxu0 0.0
    %286 = vmatpush1.msra.mxu0 0.0
    %287 = vmatprep.subr.mxu0 0.0
    %288 = vmatpush1.msra.mxu0 0.0
    %289 = vmatprep.subr.mxu0 0.0
    %290 = vmatpush1.msra.mxu0 0.0
    %291 = vmatprep.subr.mxu0 0.0
    %292 = vmatpush1.msra.mxu0 0.0
    %293 = vmatprep.subr.mxu0 0.0
    %294 = vmatpush1.msra.mxu0 0.0
    %295 = vmatprep.subr.mxu0 0.0
    %296 = vmatpush1.msra.mxu0 0.0
    %297 = vmatprep.mubr.f32.mxu0 0.0
    %298 = vmatmul.mubr.f32.gmra.mrb[0].mxu0 %v153
    %v299 = vpop.f32.mrb[0].mxu0
    %v300 = vadd.f32 0.0, %v299
    %v301 = vpop.f32.mrb[0].mxu0
    %302 = vmatprep.mubr.f32.mxu0 0.0
    %303 = vmatmul.mubr.f32.gmra.mrb[0].mxu0 %v156
    %v304 = vpop.f32.mrb[0].mxu0
    %v305 = vadd.f32 0.0, %v304
    %v306 = vpop.f32.mrb[0].mxu0
    %307 = vdwg.mxu0
    %308 = vmatprep.subr.mxu0 0.0
    %309 = vmatpush1.msra.mxu0 %v134
    %310 = vmatprep.subr.mxu0 0.0
    %311 = vmatpush1.msra.mxu0 0.0
    %312 = vmatprep.subr.mxu0 0.0
    %313 = vmatpush1.msra.mxu0 0.0
    %314 = vmatprep.subr.mxu0 0.0
    %315 = vmatpush1.msra.mxu0 0.0
    %316 = vmatprep.subr.mxu0 0.0
    %317 = vmatpush1.msra.mxu0 0.0
    %318 = vmatprep.subr.mxu0 0.0
    %319 = vmatpush1.msra.mxu0 0.0
    %320 = vmatprep.subr.mxu0 0.0
    %321 = vmatpush1.msra.mxu0 0.0
    %322 = vmatprep.subr.mxu0 0.0
    %323 = vmatpush1.msra.mxu0 0.0
    %324 = vmatprep.subr.mxu0 0.0
    %325 = vmatpush1.msra.mxu0 0.0
    %326 = vmatprep.subr.mxu0 0.0
    %327 = vmatpush1.msra.mxu0 0.0
    %328 = vmatprep.subr.mxu0 0.0
    %329 = vmatpush1.msra.mxu0 0.0
    %330 = vmatprep.subr.mxu0 0.0
    %331 = vmatpush1.msra.mxu0 0.0
    %332 = vmatprep.subr.mxu0 0.0
    %333 = vmatpush1.msra.mxu0 0.0
    %334 = vmatprep.subr.mxu0 0.0
    %335 = vmatpush1.msra.mxu0 0.0
    %336 = vmatprep.subr.mxu0 0.0
    %337 = vmatpush1.msra.mxu0 0.0
    %338 = vmatprep.subr.mxu0 0.0
    %339 = vmatpush1.msra.mxu0 0.0
    %340 = vmatprep.subr.mxu0 0.0
    %341 = vmatpush1.msra.mxu0 0.0
    %342 = vmatprep.subr.mxu0 0.0
    %343 = vmatpush1.msra.mxu0 0.0
    %344 = vmatprep.subr.mxu0 0.0
    %345 = vmatpush1.msra.mxu0 0.0
    %346 = vmatprep.subr.mxu0 0.0
    %347 = vmatpush1.msra.mxu0 0.0
    %348 = vmatprep.subr.mxu0 0.0
    %349 = vmatpush1.msra.mxu0 0.0
    %350 = vmatprep.subr.mxu0 0.0
    %351 = vmatpush1.msra.mxu0 0.0
    %352 = vmatprep.subr.mxu0 0.0
    %353 = vmatpush1.msra.mxu0 0.0
    %354 = vmatprep.subr.mxu0 0.0
    %355 = vmatpush1.msra.mxu0 0.0
    %356 = vmatprep.subr.mxu0 0.0
    %357 = vmatpush1.msra.mxu0 0.0
    %358 = vmatprep.subr.mxu0 0.0
    %359 = vmatpush1.msra.mxu0 0.0
    %360 = vmatprep.subr.mxu0 0.0
    %361 = vmatpush1.msra.mxu0 0.0
    %362 = vmatprep.subr.mxu0 0.0
    %363 = vmatpush1.msra.mxu0 0.0
    %364 = vmatprep.subr.mxu0 0.0
    %365 = vmatpush1.msra.mxu0 0.0
    %366 = vmatprep.subr.mxu0 0.0
    %367 = vmatpush1.msra.mxu0 0.0
    %368 = vmatprep.subr.mxu0 0.0
    %369 = vmatpush1.msra.mxu0 0.0
    %370 = vmatprep.subr.mxu0 0.0
    %371 = vmatpush1.msra.mxu0 0.0
    %372 = vmatprep.mubr.f32.mxu0 0.0
    %373 = vmatmul.mubr.f32.gmra.mrb[0].mxu0 %v153
    %v374 = vpop.f32.mrb[0].mxu0
    %v375 = vadd.f32 0.0, %v374
    %v376 = vpop.f32.mrb[0].mxu0
    %377 = vmatprep.mubr.f32.mxu0 0.0
    %378 = vmatmul.mubr.f32.gmra.mrb[0].mxu0 %v156
    %v379 = vpop.f32.mrb[0].mxu0
    %v380 = vadd.f32 0.0, %v379
    %v381 = vpop.f32.mrb[0].mxu0
    %382 = vdwg.mxu0
    %383 = vmatprep.subr.mxu0 0.0
    %384 = vmatpush1.msra.mxu0 %v139
    %385 = vmatprep.subr.mxu0 0.0
    %386 = vmatpush1.msra.mxu0 0.0
    %387 = vmatprep.subr.mxu0 0.0
    %388 = vmatpush1.msra.mxu0 0.0
    %389 = vmatprep.subr.mxu0 0.0
    %390 = vmatpush1.msra.mxu0 0.0
    %391 = vmatprep.subr.mxu0 0.0
    %392 = vmatpush1.msra.mxu0 0.0
    %393 = vmatprep.subr.mxu0 0.0
    %394 = vmatpush1.msra.mxu0 0.0
    %395 = vmatprep.subr.mxu0 0.0
    %396 = vmatpush1.msra.mxu0 0.0
    %397 = vmatprep.subr.mxu0 0.0
    %398 = vmatpush1.msra.mxu0 0.0
    %399 = vmatprep.subr.mxu0 0.0
    %400 = vmatpush1.msra.mxu0 0.0
    %401 = vmatprep.subr.mxu0 0.0
    %402 = vmatpush1.msra.mxu0 0.0
    %403 = vmatprep.subr.mxu0 0.0
    %404 = vmatpush1.msra.mxu0 0.0
    %405 = vmatprep.subr.mxu0 0.0
    %406 = vmatpush1.msra.mxu0 0.0
    %407 = vmatprep.subr.mxu0 0.0
    %408 = vmatpush1.msra.mxu0 0.0
    %409 = vmatprep.subr.mxu0 0.0
    %410 = vmatpush1.msra.mxu0 0.0
    %411 = vmatprep.subr.mxu0 0.0
    %412 = vmatpush1.msra.mxu0 0.0
    %413 = vmatprep.subr.mxu0 0.0
    %414 = vmatpush1.msra.mxu0 0.0
    %415 = vmatprep.subr.mxu0 0.0
    %416 = vmatpush1.msra.mxu0 0.0
    %417 = vmatprep.subr.mxu0 0.0
    %418 = vmatpush1.msra.mxu0 0.0
    %419 = vmatprep.subr.mxu0 0.0
    %420 = vmatpush1.msra.mxu0 0.0
    %421 = vmatprep.subr.mxu0 0.0
    %422 = vmatpush1.msra.mxu0 0.0
    %423 = vmatprep.subr.mxu0 0.0
    %424 = vmatpush1.msra.mxu0 0.0
    %425 = vmatprep.subr.mxu0 0.0
    %426 = vmatpush1.msra.mxu0 0.0
    %427 = vmatprep.subr.mxu0 0.0
    %428 = vmatpush1.msra.mxu0 0.0
    %429 = vmatprep.subr.mxu0 0.0
    %430 = vmatpush1.msra.mxu0 0.0
    %431 = vmatprep.subr.mxu0 0.0
    %432 = vmatpush1.msra.mxu0 0.0
    %433 = vmatprep.subr.mxu0 0.0
    %434 = vmatpush1.msra.mxu0 0.0
    %435 = vmatprep.subr.mxu0 0.0
    %436 = vmatpush1.msra.mxu0 0.0
    %437 = vmatprep.subr.mxu0 0.0
    %438 = vmatpush1.msra.mxu0 0.0
    %439 = vmatprep.subr.mxu0 0.0
    %440 = vmatpush1.msra.mxu0 0.0
    %441 = vmatprep.subr.mxu0 0.0
    %442 = vmatpush1.msra.mxu0 0.0
    %443 = vmatprep.subr.mxu0 0.0
    %444 = vmatpush1.msra.mxu0 0.0
    %445 = vmatprep.subr.mxu0 0.0
    %446 = vmatpush1.msra.mxu0 0.0
    %447 = vmatprep.mubr.f32.mxu0 0.0
    %448 = vmatmul.mubr.f32.gmra.mrb[0].mxu0 %v153
    %v449 = vpop.f32.mrb[0].mxu0
    %v450 = vadd.f32 0.0, %v449
    %v451 = vpop.f32.mrb[0].mxu0
    %452 = vmatprep.mubr.f32.mxu0 0.0
    %453 = vmatmul.mubr.f32.gmra.mrb[0].mxu0 %v156
    %v454 = vpop.f32.mrb[0].mxu0
    %v455 = vadd.f32 0.0, %v454
    %v456 = vpop.f32.mrb[0].mxu0
    %457 = vdwg.mxu0
    %458 = vmatprep.subr.mxu0 0.0
    %459 = vmatpush1.msra.mxu0 %v144
    %460 = vmatprep.subr.mxu0 0.0
    %461 = vmatpush1.msra.mxu0 0.0
    %462 = vmatprep.subr.mxu0 0.0
    %463 = vmatpush1.msra.mxu0 0.0
    %464 = vmatprep.subr.mxu0 0.0
    %465 = vmatpush1.msra.mxu0 0.0
    %466 = vmatprep.subr.mxu0 0.0
    %467 = vmatpush1.msra.mxu0 0.0
    %468 = vmatprep.subr.mxu0 0.0
    %469 = vmatpush1.msra.mxu0 0.0
    %470 = vmatprep.subr.mxu0 0.0
    %471 = vmatpush1.msra.mxu0 0.0
    %472 = vmatprep.subr.mxu0 0.0
    %473 = vmatpush1.msra.mxu0 0.0
    %474 = vmatprep.subr.mxu0 0.0
    %475 = vmatpush1.msra.mxu0 0.0
    %476 = vmatprep.subr.mxu0 0.0
    %477 = vmatpush1.msra.mxu0 0.0
    %478 = vmatprep.subr.mxu0 0.0
    %479 = vmatpush1.msra.mxu0 0.0
    %480 = vmatprep.subr.mxu0 0.0
    %481 = vmatpush1.msra.mxu0 0.0
    %482 = vmatprep.subr.mxu0 0.0
    %483 = vmatpush1.msra.mxu0 0.0
    %484 = vmatprep.subr.mxu0 0.0
    %485 = vmatpush1.msra.mxu0 0.0
    %486 = vmatprep.subr.mxu0 0.0
    %487 = vmatpush1.msra.mxu0 0.0
    %488 = vmatprep.subr.mxu0 0.0
    %489 = vmatpush1.msra.mxu0 0.0
    %490 = vmatprep.subr.mxu0 0.0
    %491 = vmatpush1.msra.mxu0 0.0
    %492 = vmatprep.subr.mxu0 0.0
    %493 = vmatpush1.msra.mxu0 0.0
    %494 = vmatprep.subr.mxu0 0.0
    %495 = vmatpush1.msra.mxu0 0.0
    %496 = vmatprep.subr.mxu0 0.0
    %497 = vmatpush1.msra.mxu0 0.0
    %498 = vmatprep.subr.mxu0 0.0
    %499 = vmatpush1.msra.mxu0 0.0
    %500 = vmatprep.subr.mxu0 0.0
    %501 = vmatpush1.msra.mxu0 0.0
    %502 = vmatprep.subr.mxu0 0.0
    %503 = vmatpush1.msra.mxu0 0.0
    %504 = vmatprep.subr.mxu0 0.0
    %505 = vmatpush1.msra.mxu0 0.0
    %506 = vmatprep.subr.mxu0 0.0
    %507 = vmatpush1.msra.mxu0 0.0
    %508 = vmatprep.subr.mxu0 0.0
    %509 = vmatpush1.msra.mxu0 0.0
    %510 = vmatprep.subr.mxu0 0.0
    %511 = vmatpush1.msra.mxu0 0.0
    %512 = vmatprep.subr.mxu0 0.0
    %513 = vmatpush1.msra.mxu0 0.0
    %514 = vmatprep.subr.mxu0 0.0
    %515 = vmatpush1.msra.mxu0 0.0
    %516 = vmatprep.subr.mxu0 0.0
    %517 = vmatpush1.msra.mxu0 0.0
    %518 = vmatprep.subr.mxu0 0.0
    %519 = vmatpush1.msra.mxu0 0.0
    %520 = vmatprep.subr.mxu0 0.0
    %521 = vmatpush1.msra.mxu0 0.0
    %522 = vmatprep.mubr.f32.mxu0 0.0
    %523 = vmatmul.mubr.f32.gmra.mrb[0].mxu0 %v153
    %v524 = vpop.f32.mrb[0].mxu0
    %v525 = vadd.f32 0.0, %v524
    %v526 = vpop.f32.mrb[0].mxu0
    %527 = vmatprep.mubr.f32.mxu0 0.0
    %528 = vmatmul.mubr.f32.gmra.mrb[0].mxu0 %v156
    %v529 = vpop.f32.mrb[0].mxu0
    %v530 = vadd.f32 0.0, %v529
    %v531 = vpop.f32.mrb[0].mxu0
    %532 = vdwg.mxu0
    %533 = vmatprep.subr.mxu0 0.0
    %534 = vmatpush1.msra.mxu0 %v149
    %535 = vmatprep.subr.mxu0 0.0
    %536 = vmatpush1.msra.mxu0 0.0
    %537 = vmatprep.subr.mxu0 0.0
    %538 = vmatpush1.msra.mxu0 0.0
    %539 = vmatprep.subr.mxu0 0.0
    %540 = vmatpush1.msra.mxu0 0.0
    %541 = vmatprep.subr.mxu0 0.0
    %542 = vmatpush1.msra.mxu0 0.0
    %543 = vmatprep.subr.mxu0 0.0
    %544 = vmatpush1.msra.mxu0 0.0
    %545 = vmatprep.subr.mxu0 0.0
    %546 = vmatpush1.msra.mxu0 0.0
    %547 = vmatprep.subr.mxu0 0.0
    %548 = vmatpush1.msra.mxu0 0.0
    %549 = vmatprep.subr.mxu0 0.0
    %550 = vmatpush1.msra.mxu0 0.0
    %551 = vmatprep.subr.mxu0 0.0
    %552 = vmatpush1.msra.mxu0 0.0
    %553 = vmatprep.subr.mxu0 0.0
    %554 = vmatpush1.msra.mxu0 0.0
    %555 = vmatprep.subr.mxu0 0.0
    %556 = vmatpush1.msra.mxu0 0.0
    %557 = vmatprep.subr.mxu0 0.0
    %558 = vmatpush1.msra.mxu0 0.0
    %559 = vmatprep.subr.mxu0 0.0
    %560 = vmatpush1.msra.mxu0 0.0
    %561 = vmatprep.subr.mxu0 0.0
    %562 = vmatpush1.msra.mxu0 0.0
    %563 = vmatprep.subr.mxu0 0.0
    %564 = vmatpush1.msra.mxu0 0.0
    %565 = vmatprep.subr.mxu0 0.0
    %566 = vmatpush1.msra.mxu0 0.0
    %567 = vmatprep.subr.mxu0 0.0
    %568 = vmatpush1.msra.mxu0 0.0
    %569 = vmatprep.subr.mxu0 0.0
    %570 = vmatpush1.msra.mxu0 0.0
    %571 = vmatprep.subr.mxu0 0.0
    %572 = vmatpush1.msra.mxu0 0.0
    %573 = vmatprep.subr.mxu0 0.0
    %574 = vmatpush1.msra.mxu0 0.0
    %575 = vmatprep.subr.mxu0 0.0
    %576 = vmatpush1.msra.mxu0 0.0
    %577 = vmatprep.subr.mxu0 0.0
    %578 = vmatpush1.msra.mxu0 0.0
    %579 = vmatprep.subr.mxu0 0.0
    %580 = vmatpush1.msra.mxu0 0.0
    %581 = vmatprep.subr.mxu0 0.0
    %582 = vmatpush1.msra.mxu0 0.0
    %583 = vmatprep.subr.mxu0 0.0
    %584 = vmatpush1.msra.mxu0 0.0
    %585 = vmatprep.subr.mxu0 0.0
    %586 = vmatpush1.msra.mxu0 0.0
    %587 = vmatprep.subr.mxu0 0.0
    %588 = vmatpush1.msra.mxu0 0.0
    %589 = vmatprep.subr.mxu0 0.0
    %590 = vmatpush1.msra.mxu0 0.0
    %591 = vmatprep.subr.mxu0 0.0
    %592 = vmatpush1.msra.mxu0 0.0
    %593 = vmatprep.subr.mxu0 0.0
    %594 = vmatpush1.msra.mxu0 0.0
    %595 = vmatprep.subr.mxu0 0.0
    %596 = vmatpush1.msra.mxu0 0.0
    %597 = vmatprep.mubr.f32.mxu0 0.0
    %598 = vmatmul.mubr.f32.gmra.mrb[0].mxu0 %v153
    %v599 = vpop.f32.mrb[0].mxu0
    %v600 = vadd.f32 0.0, %v599
    %v601 = vpop.f32.mrb[0].mxu0
    %602 = vmatprep.mubr.f32.mxu0 0.0
    %603 = vmatmul.mubr.f32.gmra.mrb[0].mxu0 %v156
    %v604 = vpop.f32.mrb[0].mxu0
    %v605 = vadd.f32 0.0, %v604
    %v606 = vpop.f32.mrb[0].mxu0
    %607 = vdwg.mxu0
    %vm608 = vcmask 130048
    %609 = vst.msk [vmem:[#allocation5] sm:$0xff] %vm608, %v225
    %610 = vst.msk [vmem:[#allocation5 + $0x8] sm:$0xff] %vm608, %v230
    %611 = vst.msk [vmem:[#allocation5 + $0x10] sm:$0xff] %vm608, %v300
    %612 = vst.msk [vmem:[#allocation5 + $0x18] sm:$0xff] %vm608, %v305
    %613 = vst.msk [vmem:[#allocation5 + $0x20] sm:$0xff] %vm608, %v375
    %614 = vst.msk [vmem:[#allocation5 + $0x28] sm:$0xff] %vm608, %v380
    %615 = vst.msk [vmem:[#allocation5 + $0x30] sm:$0xff] %vm608, %v450
    %616 = vst.msk [vmem:[#allocation5 + $0x38] sm:$0xff] %vm608, %v455
    %617 = vst.msk [vmem:[#allocation5 + $0x40] sm:$0xff] %vm608, %v525
    %618 = vst.msk [vmem:[#allocation5 + $0x48] sm:$0xff] %vm608, %v530
    %619 = vst.msk [vmem:[#allocation5 + $0x50] sm:$0xff] %vm608, %v600
    %620 = vst.msk [vmem:[#allocation5 + $0x58] sm:$0xff] %vm608, %v605
    // Predicated region
    $region18: #{tpu_custom_call.1} parent=1 // pred_check
      _
    $region19: #{tpu_custom_call.1} parent=1 // pred_check_branch
      %622 = sbr.rel (0) target = $region21
    $region20: #{tpu_custom_call.1} parent=1 // pred_region
      %s624 = ssub.s32 1536, 1536
      %625 = vsyncadd [#allocation4], %s624
      %s626 = sshll.u32 [#allocation5], 4
      %s627 = int_to_ptr.vmem [resolvable:$true] %s626
      %632 = dma.vmem_to_hbm [thread:$0]  %s627, 1536, %s3, [#allocation4], 128, 128, 8
    $region21: #{tpu_custom_call.1} parent=1 // pred_fallthru
      _
    // Predicated region
    $region22: #{tpu_custom_call.1} parent=1 // pred_check
      _
    $region23: #{tpu_custom_call.1} parent=1 // pred_check_branch
      %634 = sbr.rel (0) target = $region25
    $region24: #{tpu_custom_call.1} parent=1 // pred_region
      %635 = dma.done [#allocation4], 1536
    $region25: #{tpu_custom_call.1} parent=1 // pred_fallthru
      _
    %636 = vsyncpa [#allocation3], 1
    %637 = vsyncpa [#allocation4], 1

</llo_original>
